<compile_context>
chip_gen: v7x
topology: tpu7x:2x2x1
jax: 0.10.0
libtpu: 0.0.40
codegen_flags: <defaults>
</compile_context>

<pallas_src>
import jax
import jax.numpy as jnp
from jax.experimental import pallas as pl
from jax.experimental.pallas import tpu as pltpu


# ----------------------------- kernels ------------------------------------- #

def gcn_layer1_kernel(a_ref, xw_ref, b1_ref, w2_ref, hw_ref):
    """hw_tile = relu(A_tile @ (X W1) + b1) @ W2_pad, stored bf16, lane-dense."""
    # O(N^2)-dominant aggregation: bf16 MXU operands, f32 accumulation.
    agg = jnp.dot(a_ref[...], xw_ref[...], preferred_element_type=jnp.float32)
    # Bias + ReLU in f32 on the VPU (v5e-safe epilogue).
    h = jnp.maximum(agg + b1_ref[...], 0.0)
    # Hoisted layer-2 projection: done once per row tile here instead of being
    # recomputed over the full H every layer-2 grid step.
    hw = jnp.dot(h.astype(jnp.bfloat16), w2_ref[...],
                 preferred_element_type=jnp.float32)
    hw_ref[...] = hw.astype(hw_ref.dtype)


def gcn_layer2_kernel(a_ref, hw_ref, b2_ref, out_ref):
    """out_tile = A_tile @ HW + b2; 128 lane-dense columns (col 0 is real)."""
    agg = jnp.dot(a_ref[...], hw_ref[...], preferred_element_type=jnp.float32)
    out_ref[...] = (agg + b2_ref[0, 0]).astype(out_ref.dtype)  # b2 scalar from SMEM


# ----------------------------- glue / wrapper ------------------------------ #

def build_normalized_adjacency(edge_index, num_nodes):
    """Dense D^{-1/2} (A + I) D^{-1/2}, matching GCNConv defaults
    (add_self_loops=True, normalize=True, edge_weight=1)."""
    src, dst = edge_index[0], edge_index[1]
    adj = jnp.zeros((num_nodes, num_nodes), dtype=jnp.float32)
    # message flows src -> dst; dense row = destination, col = source
    adj = adj.at[dst, src].add(1.0)
    adj = adj + jnp.eye(num_nodes, dtype=jnp.float32)  # self loops
    deg = jnp.sum(adj, axis=1)
    deg_inv_sqrt = jnp.where(deg > 0, jax.lax.rsqrt(deg), 0.0)
    return deg_inv_sqrt[:, None] * adj * deg_inv_sqrt[None, :]


def _round_up(x, m):
    return (x + m - 1) // m * m


def _pad2d(a, rows, cols):
    return jnp.pad(a, ((0, rows - a.shape[0]), (0, cols - a.shape[1])))


_VMEM_WORKING_SET = 24 * 1024 * 1024   # target per-call pipeline footprint
_VMEM_LIMIT_BYTES = 32 * 1024 * 1024   # raise above v5e's 16 MiB scoped default


def _pick_row_tile(n_pad, resident_bytes):
    """Largest row tile whose double-buffered A slab + residents fit the budget;
    prefer >= 2 tiles so v7x's two TensorCores both get work."""
    fits = []
    for tm in (512, 256, 128):
        if n_pad % tm:
            continue
        a_dbuf = 2 * tm * n_pad * 2        # A row tile, bf16, double-buffered
        out_dbuf = 2 * tm * 128 * 4        # output tile (f32 worst case), double-buffered
        if a_dbuf + out_dbuf + resident_bytes <= _VMEM_WORKING_SET:
            fits.append(tm)
    if not fits:
        return 128
    multi = [t for t in fits if n_pad // t >= 2]
    return max(multi) if multi else max(fits)


def discriminator_forward(x, edge_index, params):
    n, f = x.shape
    hidden = params["w1"].shape[1]

    a_norm = build_normalized_adjacency(edge_index, n)

    # Padded, lane-dense sizes.
    n_pad = _round_up(n, 128)         # node axis (sublanes of A tiles, lanes of A cols)
    h_pad = _round_up(hidden, 128)    # hidden features on lanes
    o_pad = 128                       # layer-2 output padded to a full lane width

    # Hoisted tiny projection X @ W1, computed once in f32 (cheap O(N*F*H) glue).
    xw = x.astype(jnp.float32) @ params["w1"].astype(jnp.float32)

    # bf16 MXU operands (f32 accumulation happens inside the kernels).
    a_bf = _pad2d(a_norm, n_pad, n_pad).astype(jnp.bfloat16)
    xw_bf = _pad2d(xw, n_pad, h_pad).astype(jnp.bfloat16)
    b1_f32 = _pad2d(params["b1"].reshape(1, -1), 1, h_pad).astype(jnp.float32)
    w2_bf = _pad2d(params["w2"], h_pad, o_pad).astype(jnp.bfloat16)  # zeros in cols 1..127
    b2_f32 = params["b2"].reshape(1, 1).astype(jnp.float32)

    # Resident (constant index_map) operands — Pallas double-buffers them too.
    resident_bytes = 2 * (xw_bf.size * 2 + b1_f32.size * 4 + w2_bf.size * 2
                          + n_pad * o_pad * 2)   # + hw resident used in layer 2
    tm = _pick_row_tile(n_pad, resident_bytes)
    grid = (n_pad // tm,)

    cparams = pltpu.CompilerParams(
        dimension_semantics=("parallel",),
        vmem_limit_bytes=_VMEM_LIMIT_BYTES,
    )

    # ---- layer 1 (+ hoisted layer-2 projection): hw = relu(A @ XW1 + b1) @ W2 ---- #
    hw = pl.pallas_call(
        gcn_layer1_kernel,
        out_shape=jax.ShapeDtypeStruct((n_pad, o_pad), jnp.bfloat16),
        grid=grid,
        in_specs=[
            pl.BlockSpec((tm, n_pad), lambda i: (i, 0)),     # A row tile (streamed)
            pl.BlockSpec((n_pad, h_pad), lambda i: (0, 0)),  # XW1, resident across steps
            pl.BlockSpec((1, h_pad), lambda i: (0, 0)),      # b1 (f32)
            pl.BlockSpec((h_pad, o_pad), lambda i: (0, 0)),  # W2 padded to 128 cols
        ],
        out_specs=pl.BlockSpec((tm, o_pad), lambda i: (i, 0)),
        compiler_params=cparams,
    )(a_bf, xw_bf, b1_f32, w2_bf)

    # ---- layer 2: out = A @ HW + b2, 128-wide lane-dense output ---- #
    out_pad = pl.pallas_call(
        gcn_layer2_kernel,
        out_shape=jax.ShapeDtypeStruct((n_pad, o_pad), jnp.float32),
        grid=grid,
        in_specs=[
            pl.BlockSpec((tm, n_pad), lambda i: (i, 0)),     # A row tile (streamed)
            pl.BlockSpec((n_pad, o_pad), lambda i: (0, 0)),  # HW, resident across steps
            pl.BlockSpec(memory_space=pltpu.MemorySpace.SMEM),  # b2 scalar in SMEM
        ],
        out_specs=pl.BlockSpec((tm, o_pad), lambda i: (i, 0)),
        compiler_params=cparams,
    )(a_bf, hw, b2_f32)

    # Only column 0 / first n rows are real; the rest is zero-padding / bias fill.
    return out_pad[:n, :1]


def reference_forward(x, edge_index, params):
    """Pure-JAX f32 reference matching the PyTorch module."""
    a = build_normalized_adjacency(edge_index, x.shape[0])
    h = jnp.maximum(a @ (x @ params["w1"]) + params["b1"], 0.0)
    return a @ (h @ params["w2"]) + params["b2"]


def init_params(key, input_dim, hidden_dim):
    k1, k2 = jax.random.split(key)
    # Glorot-uniform, like torch_geometric GCNConv; biases start at zero.
    lim1 = (6.0 / (input_dim + hidden_dim)) ** 0.5
    lim2 = (6.0 / (hidden_dim + 1)) ** 0.5
    return {
        "w1": jax.random.uniform(k1, (input_dim, hidden_dim), jnp.float32, -lim1, lim1),
        "b1": jnp.zeros((1, hidden_dim), jnp.float32),
        "w2": jax.random.uniform(k2, (hidden_dim, 1), jnp.float32, -lim2, lim2),
        "b2": jnp.zeros((1, 1), jnp.float32),
    }


if __name__ == "__main__":
    key = jax.random.PRNGKey(0)
    k_x, k_e, k_p = jax.random.split(key, 3)

    num_nodes = 16
    input_dim = 8
    hidden_dim = 32
    num_edges = 24

    x = jax.random.normal(k_x, (num_nodes, input_dim), dtype=jnp.float32)
    edge_index = jax.random.randint(k_e, (2, num_edges), 0, num_nodes, dtype=jnp.int32)
    params = init_params(k_p, input_dim, hidden_dim)

    forward = jax.jit(discriminator_forward)
    out = forward(x, edge_index, params)
    jax.block_until_ready(out)

    assert out.shape == (num_nodes, 1)

    # Loose tolerance: bf16 MXU operands vs f32 reference.
    ref = reference_forward(x, edge_index, params)
    assert jnp.allclose(out, ref, atol=5e-2, rtol=5e-2), (
        f"max abs err {float(jnp.max(jnp.abs(out - ref)))}"
    )

    print("KERNEL_OK")
</pallas_src>

<mosaic_0001>
module attributes {stable_mosaic.version = 11 : i64} {
  func.func @gcn_layer2_kernel(%arg0: i32, %arg1: memref<128x128xbf16, #tpu.memory_space<vmem>>, %arg2: memref<128x128xbf16, #tpu.memory_space<vmem>>, %arg3: memref<1x1xf32, #tpu.memory_space<smem>>, %arg4: memref<128x128xf32, #tpu.memory_space<vmem>>) attributes {dimension_semantics = [#tpu.dimension_semantics<parallel>], iteration_bounds = array<i64: 1>, scalar_prefetch = 0 : i64, scratch_operands = 0 : i64, tpu.core_type = #tpu.core_type<tc>, window_params = [{transform_indices = @transform_0, window_bounds = array<i64: 128, 128>}, {pipeline_mode = #tpu.pipeline_mode<synchronous>, transform_indices = @transform_1, window_bounds = array<i64: 128, 128>}, {transform_indices = @transform_2, window_bounds = array<i64: 1, 1>}, {transform_indices = @transform_3, window_bounds = array<i64: 128, 128>}]} {
    %c0 = arith.constant 0 : index
    %c0_0 = arith.constant 0 : index
    %0 = vector.load %arg1[%c0, %c0_0] : memref<128x128xbf16, #tpu.memory_space<vmem>>, vector<128x128xbf16>
    %c0_1 = arith.constant 0 : index
    %c0_2 = arith.constant 0 : index
    %1 = vector.load %arg2[%c0_1, %c0_2] : memref<128x128xbf16, #tpu.memory_space<vmem>>, vector<128x128xbf16>
    %cst = arith.constant dense<0.000000e+00> : vector<128x128xf32>
    %2 = tpu.matmul %0, %1, %cst {dimension_numbers = #tpu.dot_dimension_numbers<[1], [0], [0], [1], [0, 0, 1, 1], [], []>} : vector<128x128xbf16>, vector<128x128xbf16>, vector<128x128xf32> -> vector<128x128xf32>
    %c0_3 = arith.constant 0 : index
    %c0_4 = arith.constant 0 : index
    %3 = memref.load %arg3[%c0_3, %c0_4] : memref<1x1xf32, #tpu.memory_space<smem>>
    %4 = vector.broadcast %3 : f32 to vector<128x128xf32>
    %5 = arith.addf %2, %4 : vector<128x128xf32>
    %c0_5 = arith.constant 0 : index
    %c0_6 = arith.constant 0 : index
    %6 = vector.load %arg4[%c0_5, %c0_6] : memref<128x128xf32, #tpu.memory_space<vmem>>, vector<128x128xf32>
    tpu.vector_store %arg4[%c0_5, %c0_6], %5 {strides = array<i32>} : memref<128x128xf32, #tpu.memory_space<vmem>>, vector<128x128xf32>,
    return
  }
  func.func @transform_0(%arg0: i32) -> (i32, i32) {
    %c0_i32 = arith.constant 0 : i32
    %c0_i32_0 = arith.constant 0 : i32
    return %arg0, %c0_i32 : i32, i32
  }
  func.func @transform_1(%arg0: i32) -> (i32, i32) {
    %c0_i32 = arith.constant 0 : i32
    %c0_i32_0 = arith.constant 0 : i32
    %c0_i32_1 = arith.constant 0 : i32
    return %c0_i32, %c0_i32_0 : i32, i32
  }
  func.func @transform_2(%arg0: i32) -> (i32, i32) {
    %c0_i32 = arith.constant 0 : i32
    %c0_i32_0 = arith.constant 0 : i32
    %c0_i32_1 = arith.constant 0 : i32
    return %c0_i32, %c0_i32_0 : i32, i32
  }
  func.func @transform_3(%arg0: i32) -> (i32, i32) {
    %c0_i32 = arith.constant 0 : i32
    %c0_i32_0 = arith.constant 0 : i32
    return %arg0, %c0_i32 : i32, i32
  }
}

module attributes {stable_mosaic.version = 11 : i64} {
  func.func @gcn_layer1_kernel(%arg0: i32, %arg1: memref<128x128xbf16, #tpu.memory_space<vmem>>, %arg2: memref<128x128xbf16, #tpu.memory_space<vmem>>, %arg3: memref<1x128xf32, #tpu.memory_space<vmem>>, %arg4: memref<128x128xbf16, #tpu.memory_space<vmem>>, %arg5: memref<128x128xbf16, #tpu.memory_space<vmem>>) attributes {dimension_semantics = [#tpu.dimension_semantics<parallel>], iteration_bounds = array<i64: 1>, scalar_prefetch = 0 : i64, scratch_operands = 0 : i64, tpu.core_type = #tpu.core_type<tc>, window_params = [{transform_indices = @transform_0, window_bounds = array<i64: 128, 128>}, {pipeline_mode = #tpu.pipeline_mode<synchronous>, transform_indices = @transform_1, window_bounds = array<i64: 128, 128>}, {pipeline_mode = #tpu.pipeline_mode<synchronous>, transform_indices = @transform_2, window_bounds = array<i64: 1, 128>}, {pipeline_mode = #tpu.pipeline_mode<synchronous>, transform_indices = @transform_3, window_bounds = array<i64: 128, 128>}, {transform_indices = @transform_4, window_bounds = array<i64: 128, 128>}]} {
    %c0 = arith.constant 0 : index
    %c0_0 = arith.constant 0 : index
    %0 = vector.load %arg1[%c0, %c0_0] : memref<128x128xbf16, #tpu.memory_space<vmem>>, vector<128x128xbf16>
    %c0_1 = arith.constant 0 : index
    %c0_2 = arith.constant 0 : index
    %1 = vector.load %arg2[%c0_1, %c0_2] : memref<128x128xbf16, #tpu.memory_space<vmem>>, vector<128x128xbf16>
    %cst = arith.constant dense<0.000000e+00> : vector<128x128xf32>
    %2 = tpu.matmul %0, %1, %cst {dimension_numbers = #tpu.dot_dimension_numbers<[1], [0], [0], [1], [0, 0, 1, 1], [], []>} : vector<128x128xbf16>, vector<128x128xbf16>, vector<128x128xf32> -> vector<128x128xf32>
    %c0_3 = arith.constant 0 : index
    %c0_4 = arith.constant 0 : index
    %3 = vector.load %arg3[%c0_3, %c0_4] : memref<1x128xf32, #tpu.memory_space<vmem>>, vector<1x128xf32>
    %4 = vector.broadcast %3 : vector<1x128xf32> to vector<128x128xf32>
    %5 = arith.addf %2, %4 : vector<128x128xf32>
    %cst_5 = arith.constant 0.000000e+00 : f32
    %6 = vector.broadcast %cst_5 : f32 to vector<128x128xf32>
    %7 = arith.maximumf %5, %6 : vector<128x128xf32>
    %8 = arith.truncf %7 : vector<128x128xf32> to vector<128x128xbf16>
    %c0_6 = arith.constant 0 : index
    %c0_7 = arith.constant 0 : index
    %9 = vector.load %arg4[%c0_6, %c0_7] : memref<128x128xbf16, #tpu.memory_space<vmem>>, vector<128x128xbf16>
    %cst_8 = arith.constant dense<0.000000e+00> : vector<128x128xf32>
    %10 = tpu.matmul %8, %9, %cst_8 {dimension_numbers = #tpu.dot_dimension_numbers<[1], [0], [0], [1], [0, 0, 1, 1], [], []>} : vector<128x128xbf16>, vector<128x128xbf16>, vector<128x128xf32> -> vector<128x128xf32>
    %11 = arith.truncf %10 : vector<128x128xf32> to vector<128x128xbf16>
    %c0_9 = arith.constant 0 : index
    %c0_10 = arith.constant 0 : index
    %12 = vector.load %arg5[%c0_9, %c0_10] : memref<128x128xbf16, #tpu.memory_space<vmem>>, vector<128x128xbf16>
    tpu.vector_store %arg5[%c0_9, %c0_10], %11 {strides = array<i32>} : memref<128x128xbf16, #tpu.memory_space<vmem>>, vector<128x128xbf16>,
    return
  }
  func.func @transform_0(%arg0: i32) -> (i32, i32) {
    %c0_i32 = arith.constant 0 : i32
    %c0_i32_0 = arith.constant 0 : i32
    return %arg0, %c0_i32 : i32, i32
  }
  func.func @transform_1(%arg0: i32) -> (i32, i32) {
    %c0_i32 = arith.constant 0 : i32
    %c0_i32_0 = arith.constant 0 : i32
    %c0_i32_1 = arith.constant 0 : i32
    return %c0_i32, %c0_i32_0 : i32, i32
  }
  func.func @transform_2(%arg0: i32) -> (i32, i32) {
    %c0_i32 = arith.constant 0 : i32
    %c0_i32_0 = arith.constant 0 : i32
    %c0_i32_1 = arith.constant 0 : i32
    return %c0_i32, %c0_i32_0 : i32, i32
  }
  func.func @transform_3(%arg0: i32) -> (i32, i32) {
    %c0_i32 = arith.constant 0 : i32
    %c0_i32_0 = arith.constant 0 : i32
    %c0_i32_1 = arith.constant 0 : i32
    return %c0_i32, %c0_i32_0 : i32, i32
  }
  func.func @transform_4(%arg0: i32) -> (i32, i32) {
    %c0_i32 = arith.constant 0 : i32
    %c0_i32_0 = arith.constant 0 : i32
    return %arg0, %c0_i32 : i32, i32
  }
}

</mosaic_0001>

<llo_original>
// kernel: discriminator_forward.3
$region0: #{discriminator_forward.3}
  #allocation0 [shape = 'u32[]', space=smem, size = 0x4, offset = 0x4, fixed_abs, tag = 'smem constant byte address 0x4 - core index']
  #allocation1 [shape = 'u32[144,128]{1,0:T(1,128)}', space=vmem, size = 0x12000, scoped, tag = 'internal scratch']
  #allocation2 [shape = 'f32[1,1]{1,0:T(1,128)S(6)}', space=smem, size = 0x200, scoped, tag = 'scoped memory for discriminator_forward.3']
  %s0 = inlined_call_operand.vmem [shape: bf16[128,128], index: 0, kind: input, shape index: {}]
  %s1 = inlined_call_operand.vmem [shape: bf16[128,128], index: 1, kind: input, shape index: {}]
  %s2 = inlined_call_operand.<no memory space> [shape: f32[1,1], index: 2, kind: input, shape index: {}]
  %s3 = inlined_call_operand.vmem [shape: f32[128,128], index: 3, kind: output, shape index: {}]
  %s4 = sld [smem:[#allocation0]]
  $region22: #{discriminator_forward.3} parent=0
    _
  %s6 = ssub.s32 1, %s4
  %s7 = scalar_select 0, %s6, %s4
  %8 = sst [smem:[#allocation2]] %s2
  // Predicated region
  $region2: #{discriminator_forward.3} parent=0 // pred_check
    _
  $region3: #{discriminator_forward.3} parent=0 // pred_check_branch
    %10 = sbr.rel (0) target = $region5
  $region4: #{discriminator_forward.3} parent=0 // pred_region
    _
  $region5: #{discriminator_forward.3} parent=0 // pred_fallthru
    _
  // Predicated region
  $region6: #{discriminator_forward.3} parent=0 // pred_check
    _
  $region7: #{discriminator_forward.3} parent=0 // pred_check_branch
    %12 = sbr.rel (0) target = $region9
  $region8: #{discriminator_forward.3} parent=0 // pred_region
    _
  $region9: #{discriminator_forward.3} parent=0 // pred_fallthru
    _
  // Predicated region
  $region10: #{discriminator_forward.3} parent=0 // pred_check
    _
  $region11: #{discriminator_forward.3} parent=0 // pred_check_branch
    %14 = sbr.rel (0) target = $region13
  $region12: #{discriminator_forward.3} parent=0 // pred_region
    _
  $region13: #{discriminator_forward.3} parent=0 // pred_fallthru
    _
  %v16 = vld [vmem:[%s0] sm:$0xf]
  %v17 = vld [vmem:[%s0 + $0x4] sm:$0xf]
  %v18 = vld [vmem:[%s0 + $0x8] sm:$0xf]
  %v19 = vld [vmem:[%s0 + $0xc] sm:$0xf]
  %v20 = vld [vmem:[%s0 + $0x10] sm:$0xf]
  %v21 = vld [vmem:[%s0 + $0x14] sm:$0xf]
  %v22 = vld [vmem:[%s0 + $0x18] sm:$0xf]
  %v23 = vld [vmem:[%s0 + $0x1c] sm:$0xf]
  %v24 = vld [vmem:[%s0 + $0x20] sm:$0xf]
  %v25 = vld [vmem:[%s0 + $0x24] sm:$0xf]
  %v26 = vld [vmem:[%s0 + $0x28] sm:$0xf]
  %v27 = vld [vmem:[%s0 + $0x2c] sm:$0xf]
  %v28 = vld [vmem:[%s0 + $0x30] sm:$0xf]
  %v29 = vld [vmem:[%s0 + $0x34] sm:$0xf]
  %v30 = vld [vmem:[%s0 + $0x38] sm:$0xf]
  %v31 = vld [vmem:[%s0 + $0x3c] sm:$0xf]
  %v32 = vld [vmem:[%s1] sm:$0xf]
  %v33 = vld [vmem:[%s1 + $0x4] sm:$0xf]
  %v34 = vld [vmem:[%s1 + $0x8] sm:$0xf]
  %v35 = vld [vmem:[%s1 + $0xc] sm:$0xf]
  %v36 = vld [vmem:[%s1 + $0x10] sm:$0xf]
  %v37 = vld [vmem:[%s1 + $0x14] sm:$0xf]
  %v38 = vld [vmem:[%s1 + $0x18] sm:$0xf]
  %v39 = vld [vmem:[%s1 + $0x1c] sm:$0xf]
  %v40 = vld [vmem:[%s1 + $0x20] sm:$0xf]
  %v41 = vld [vmem:[%s1 + $0x24] sm:$0xf]
  %v42 = vld [vmem:[%s1 + $0x28] sm:$0xf]
  %v43 = vld [vmem:[%s1 + $0x2c] sm:$0xf]
  %v44 = vld [vmem:[%s1 + $0x30] sm:$0xf]
  %v45 = vld [vmem:[%s1 + $0x34] sm:$0xf]
  %v46 = vld [vmem:[%s1 + $0x38] sm:$0xf]
  %v47 = vld [vmem:[%s1 + $0x3c] sm:$0xf]
  %s48 = sld [smem:[#allocation2]]
  %v49 = vstv %s48
  %v66 = vunpack.c.l.b16 %v16
  %v67 = vunpack.c.l.b16 %v17
  %v68 = vunpack.c.l.b16 %v18
  %v69 = vunpack.c.l.b16 %v19
  %v70 = vunpack.c.l.b16 %v20
  %v71 = vunpack.c.l.b16 %v21
  %v72 = vunpack.c.l.b16 %v22
  %v73 = vunpack.c.l.b16 %v23
  %v74 = vunpack.c.l.b16 %v24
  %v75 = vunpack.c.l.b16 %v25
  %v76 = vunpack.c.l.b16 %v26
  %v77 = vunpack.c.l.b16 %v27
  %v78 = vunpack.c.l.b16 %v28
  %v79 = vunpack.c.l.b16 %v29
  %v80 = vunpack.c.l.b16 %v30
  %v81 = vunpack.c.l.b16 %v31
  %v82 = vpack.c.b16 %v67, %v66
  %v83 = vpack.c.b16 %v69, %v68
  %v84 = vpack.c.b16 %v71, %v70
  %v85 = vpack.c.b16 %v73, %v72
  %v86 = vpack.c.b16 %v75, %v74
  %v87 = vpack.c.b16 %v77, %v76
  %v88 = vpack.c.b16 %v79, %v78
  %v89 = vpack.c.b16 %v81, %v80
  %v114 = vunpack.c.l.b16 %v32
  %v115 = vunpack.c.l.b16 %v33
  %v116 = vunpack.c.l.b16 %v34
  %v117 = vunpack.c.l.b16 %v35
  %v118 = vunpack.c.l.b16 %v36
  %v119 = vunpack.c.l.b16 %v37
  %v120 = vunpack.c.l.b16 %v38
  %v121 = vunpack.c.l.b16 %v39
  %v122 = vunpack.c.l.b16 %v40
  %v123 = vunpack.c.l.b16 %v41
  %v124 = vunpack.c.l.b16 %v42
  %v125 = vunpack.c.l.b16 %v43
  %v126 = vunpack.c.l.b16 %v44
  %v127 = vunpack.c.l.b16 %v45
  %v128 = vunpack.c.l.b16 %v46
  %v129 = vunpack.c.l.b16 %v47
  %v130 = vpack.c.b16 %v115, %v114
  %v131 = vpack.c.b16 %v117, %v116
  %v132 = vpack.c.b16 %v119, %v118
  %v133 = vpack.c.b16 %v121, %v120
  %v134 = vpack.c.b16 %v123, %v122
  %v135 = vpack.c.b16 %v125, %v124
  %v136 = vpack.c.b16 %v127, %v126
  %v137 = vpack.c.b16 %v129, %v128
  %146 = vmatprep.subr.bf16.mxu0 0
  %147 = vmatpush1.bf16.msra.mxu0 %v130
  %148 = vmatprep.subr.bf16.mxu0 0
  %149 = vmatpush1.bf16.msra.mxu0 %v131
  %150 = vmatprep.subr.bf16.mxu0 0
  %151 = vmatpush1.bf16.msra.mxu0 %v132
  %152 = vmatprep.subr.bf16.mxu0 0
  %153 = vmatpush1.bf16.msra.mxu0 %v133
  %154 = vmatprep.subr.bf16.mxu0 0
  %155 = vmatpush1.bf16.msra.mxu0 %v134
  %156 = vmatprep.subr.bf16.mxu0 0
  %157 = vmatpush1.bf16.msra.mxu0 %v135
  %158 = vmatprep.subr.bf16.mxu0 0
  %159 = vmatpush1.bf16.msra.mxu0 %v136
  %160 = vmatprep.subr.bf16.mxu0 0
  %161 = vmatpush1.bf16.msra.mxu0 %v137
  %162 = vmatprep.subr.bf16.mxu0 0
  %163 = vmatpush1.bf16.msra.mxu0 0
  %164 = vmatprep.subr.bf16.mxu0 0
  %165 = vmatpush1.bf16.msra.mxu0 0
  %166 = vmatprep.subr.bf16.mxu0 0
  %167 = vmatpush1.bf16.msra.mxu0 0
  %168 = vmatprep.subr.bf16.mxu0 0
  %169 = vmatpush1.bf16.msra.mxu0 0
  %170 = vmatprep.subr.bf16.mxu0 0
  %171 = vmatpush1.bf16.msra.mxu0 0
  %172 = vmatprep.subr.bf16.mxu0 0
  %173 = vmatpush1.bf16.msra.mxu0 0
  %174 = vmatprep.subr.bf16.mxu0 0
  %175 = vmatpush1.bf16.msra.mxu0 0
  %176 = vmatprep.subr.bf16.mxu0 0
  %177 = vmatpush1.bf16.msra.mxu0 0
  %178 = vmatprep.mubr.bf16.mxu0 0
  %179 = vmatmul.mubr.bf16.gmra.mrb[0].mxu0 %v82
  %v180 = vpop.f32.mrb[0].mxu0
  %v181 = vadd.f32 %v49, %v180
  %v182 = vpop.f32.mrb[0].mxu0
  %v183 = vpop.f32.mrb[0].mxu0
  %v184 = vadd.f32 %v49, %v183
  %v185 = vpop.f32.mrb[0].mxu0
  %186 = vmatprep.mubr.bf16.mxu0 0
  %187 = vmatmul.mubr.bf16.gmra.mrb[0].mxu0 %v83
  %v188 = vpop.f32.mrb[0].mxu0
  %v189 = vadd.f32 %v49, %v188
  %v190 = vpop.f32.mrb[0].mxu0
  %v191 = vpop.f32.mrb[0].mxu0
  %v192 = vadd.f32 %v49, %v191
  %v193 = vpop.f32.mrb[0].mxu0
  %194 = vmatprep.mubr.bf16.mxu0 0
  %195 = vmatmul.mubr.bf16.gmra.mrb[0].mxu0 %v84
  %v196 = vpop.f32.mrb[0].mxu0
  %v197 = vadd.f32 %v49, %v196
  %v198 = vpop.f32.mrb[0].mxu0
  %v199 = vpop.f32.mrb[0].mxu0
  %v200 = vadd.f32 %v49, %v199
  %v201 = vpop.f32.mrb[0].mxu0
  %202 = vmatprep.mubr.bf16.mxu0 0
  %203 = vmatmul.mubr.bf16.gmra.mrb[0].mxu0 %v85
  %v204 = vpop.f32.mrb[0].mxu0
  %v205 = vadd.f32 %v49, %v204
  %v206 = vpop.f32.mrb[0].mxu0
  %v207 = vpop.f32.mrb[0].mxu0
  %v208 = vadd.f32 %v49, %v207
  %v209 = vpop.f32.mrb[0].mxu0
  %210 = vmatprep.mubr.bf16.mxu0 0
  %211 = vmatmul.mubr.bf16.gmra.mrb[0].mxu0 %v86
  %v212 = vpop.f32.mrb[0].mxu0
  %v213 = vadd.f32 %v49, %v212
  %v214 = vpop.f32.mrb[0].mxu0
  %v215 = vpop.f32.mrb[0].mxu0
  %v216 = vadd.f32 %v49, %v215
  %v217 = vpop.f32.mrb[0].mxu0
  %218 = vmatprep.mubr.bf16.mxu0 0
  %219 = vmatmul.mubr.bf16.gmra.mrb[0].mxu0 %v87
  %v220 = vpop.f32.mrb[0].mxu0
  %v221 = vadd.f32 %v49, %v220
  %v222 = vpop.f32.mrb[0].mxu0
  %v223 = vpop.f32.mrb[0].mxu0
  %v224 = vadd.f32 %v49, %v223
  %v225 = vpop.f32.mrb[0].mxu0
  %226 = vmatprep.mubr.bf16.mxu0 0
  %227 = vmatmul.mubr.bf16.gmra.mrb[0].mxu0 %v88
  %v228 = vpop.f32.mrb[0].mxu0
  %v229 = vadd.f32 %v49, %v228
  %v230 = vpop.f32.mrb[0].mxu0
  %v231 = vpop.f32.mrb[0].mxu0
  %v232 = vadd.f32 %v49, %v231
  %v233 = vpop.f32.mrb[0].mxu0
  %234 = vmatprep.mubr.bf16.mxu0 0
  %235 = vmatmul.mubr.bf16.gmra.mrb[0].mxu0 %v89
  %v236 = vpop.f32.mrb[0].mxu0
  %v237 = vadd.f32 %v49, %v236
  %v238 = vpop.f32.mrb[0].mxu0
  %v239 = vpop.f32.mrb[0].mxu0
  %v240 = vadd.f32 %v49, %v239
  %v241 = vpop.f32.mrb[0].mxu0
  %242 = vdwg.mxu0
  %243 = vst [vmem:[%s3] sm:$0xff] %v181
  %244 = vst [vmem:[%s3 + $0x8] sm:$0xff] %v184
  %245 = vst [vmem:[%s3 + $0x10] sm:$0xff] %v189
  %246 = vst [vmem:[%s3 + $0x18] sm:$0xff] %v192
  %247 = vst [vmem:[%s3 + $0x20] sm:$0xff] %v197
  %248 = vst [vmem:[%s3 + $0x28] sm:$0xff] %v200
  %249 = vst [vmem:[%s3 + $0x30] sm:$0xff] %v205
  %250 = vst [vmem:[%s3 + $0x38] sm:$0xff] %v208
  %251 = vst [vmem:[%s3 + $0x40] sm:$0xff] %v213
  %252 = vst [vmem:[%s3 + $0x48] sm:$0xff] %v216
  %253 = vst [vmem:[%s3 + $0x50] sm:$0xff] %v221
  %254 = vst [vmem:[%s3 + $0x58] sm:$0xff] %v224
  %255 = vst [vmem:[%s3 + $0x60] sm:$0xff] %v229
  %256 = vst [vmem:[%s3 + $0x68] sm:$0xff] %v232
  %257 = vst [vmem:[%s3 + $0x70] sm:$0xff] %v237
  %258 = vst [vmem:[%s3 + $0x78] sm:$0xff] %v240
  // Predicated region
  $region14: #{discriminator_forward.3} parent=0 // pred_check
    _
  $region15: #{discriminator_forward.3} parent=0 // pred_check_branch
    %260 = sbr.rel (0) target = $region17
  $region16: #{discriminator_forward.3} parent=0 // pred_region
    _
  $region17: #{discriminator_forward.3} parent=0 // pred_fallthru
    _
  // Predicated region
  $region18: #{discriminator_forward.3} parent=0 // pred_check
    _
  $region19: #{discriminator_forward.3} parent=0 // pred_check_branch
    %262 = sbr.rel (0) target = $region21
  $region20: #{discriminator_forward.3} parent=0 // pred_region
    _
  $region21: #{discriminator_forward.3} parent=0 // pred_fallthru
    _

// kernel: discriminator_forward.2
$region0: #{discriminator_forward.2}
  #allocation0 [shape = 'u32[]', space=smem, size = 0x4, offset = 0x4, fixed_abs, tag = 'smem constant byte address 0x4 - core index']
  #allocation1 [shape = 'u32[144,128]{1,0:T(1,128)}', space=vmem, size = 0x12000, scoped, tag = 'internal scratch']
  %s0 = inlined_call_operand.vmem [shape: bf16[128,128], index: 0, kind: input, shape index: {}]
  %s1 = inlined_call_operand.vmem [shape: bf16[128,128], index: 1, kind: input, shape index: {}]
  %s2 = inlined_call_operand.vmem [shape: f32[1,128], index: 2, kind: input, shape index: {}]
  %s3 = inlined_call_operand.vmem [shape: bf16[128,128], index: 3, kind: input, shape index: {}]
  %s4 = inlined_call_operand.vmem [shape: bf16[128,128], index: 4, kind: output, shape index: {}]
  %s5 = sld [smem:[#allocation0]]
  $region26: #{discriminator_forward.2} parent=0
    _
  %s7 = ssub.s32 1, %s5
  %s8 = scalar_select 0, %s7, %s5
  // Predicated region
  $region2: #{discriminator_forward.2} parent=0 // pred_check
    _
  $region3: #{discriminator_forward.2} parent=0 // pred_check_branch
    %10 = sbr.rel (0) target = $region5
  $region4: #{discriminator_forward.2} parent=0 // pred_region
    _
  $region5: #{discriminator_forward.2} parent=0 // pred_fallthru
    _
  // Predicated region
  $region6: #{discriminator_forward.2} parent=0 // pred_check
    _
  $region7: #{discriminator_forward.2} parent=0 // pred_check_branch
    %12 = sbr.rel (0) target = $region9
  $region8: #{discriminator_forward.2} parent=0 // pred_region
    _
  $region9: #{discriminator_forward.2} parent=0 // pred_fallthru
    _
  // Predicated region
  $region10: #{discriminator_forward.2} parent=0 // pred_check
    _
  $region11: #{discriminator_forward.2} parent=0 // pred_check_branch
    %14 = sbr.rel (0) target = $region13
  $region12: #{discriminator_forward.2} parent=0 // pred_region
    _
  $region13: #{discriminator_forward.2} parent=0 // pred_fallthru
    _
  // Predicated region
  $region14: #{discriminator_forward.2} parent=0 // pred_check
    _
  $region15: #{discriminator_forward.2} parent=0 // pred_check_branch
    %16 = sbr.rel (0) target = $region17
  $region16: #{discriminator_forward.2} parent=0 // pred_region
    _
  $region17: #{discriminator_forward.2} parent=0 // pred_fallthru
    _
  %v18 = vld [vmem:[%s0] sm:$0xf]
  %v19 = vld [vmem:[%s0 + $0x4] sm:$0xf]
  %v20 = vld [vmem:[%s0 + $0x8] sm:$0xf]
  %v21 = vld [vmem:[%s0 + $0xc] sm:$0xf]
  %v22 = vld [vmem:[%s0 + $0x10] sm:$0xf]
  %v23 = vld [vmem:[%s0 + $0x14] sm:$0xf]
  %v24 = vld [vmem:[%s0 + $0x18] sm:$0xf]
  %v25 = vld [vmem:[%s0 + $0x1c] sm:$0xf]
  %v26 = vld [vmem:[%s0 + $0x20] sm:$0xf]
  %v27 = vld [vmem:[%s0 + $0x24] sm:$0xf]
  %v28 = vld [vmem:[%s0 + $0x28] sm:$0xf]
  %v29 = vld [vmem:[%s0 + $0x2c] sm:$0xf]
  %v30 = vld [vmem:[%s0 + $0x30] sm:$0xf]
  %v31 = vld [vmem:[%s0 + $0x34] sm:$0xf]
  %v32 = vld [vmem:[%s0 + $0x38] sm:$0xf]
  %v33 = vld [vmem:[%s0 + $0x3c] sm:$0xf]
  %v34 = vld [vmem:[%s1] sm:$0xf]
  %v35 = vld [vmem:[%s1 + $0x4] sm:$0xf]
  %v36 = vld [vmem:[%s1 + $0x8] sm:$0xf]
  %v37 = vld [vmem:[%s1 + $0xc] sm:$0xf]
  %v38 = vld [vmem:[%s1 + $0x10] sm:$0xf]
  %v39 = vld [vmem:[%s1 + $0x14] sm:$0xf]
  %v40 = vld [vmem:[%s1 + $0x18] sm:$0xf]
  %v41 = vld [vmem:[%s1 + $0x1c] sm:$0xf]
  %v42 = vld [vmem:[%s1 + $0x20] sm:$0xf]
  %v43 = vld [vmem:[%s1 + $0x24] sm:$0xf]
  %v44 = vld [vmem:[%s1 + $0x28] sm:$0xf]
  %v45 = vld [vmem:[%s1 + $0x2c] sm:$0xf]
  %v46 = vld [vmem:[%s1 + $0x30] sm:$0xf]
  %v47 = vld [vmem:[%s1 + $0x34] sm:$0xf]
  %v48 = vld [vmem:[%s1 + $0x38] sm:$0xf]
  %v49 = vld [vmem:[%s1 + $0x3c] sm:$0xf]
  %v50 = vld [vmem:[%s2] sm:$0x1]
  %v52 = vlaneseq
  %v53 = vshrl.u32 %v52, 7
  %v54 = vsub.s32 0, %v53
  %v55 = vrot.slane %v50, %v54
  %v73 = vunpack.c.l.b16 %v18
  %v74 = vunpack.c.l.b16 %v19
  %v75 = vunpack.c.l.b16 %v20
  %v76 = vunpack.c.l.b16 %v21
  %v77 = vunpack.c.l.b16 %v22
  %v78 = vunpack.c.l.b16 %v23
  %v79 = vunpack.c.l.b16 %v24
  %v80 = vunpack.c.l.b16 %v25
  %v81 = vunpack.c.l.b16 %v26
  %v82 = vunpack.c.l.b16 %v27
  %v83 = vunpack.c.l.b16 %v28
  %v84 = vunpack.c.l.b16 %v29
  %v85 = vunpack.c.l.b16 %v30
  %v86 = vunpack.c.l.b16 %v31
  %v87 = vunpack.c.l.b16 %v32
  %v88 = vunpack.c.l.b16 %v33
  %v89 = vpack.c.b16 %v74, %v73
  %v90 = vpack.c.b16 %v76, %v75
  %v91 = vpack.c.b16 %v78, %v77
  %v92 = vpack.c.b16 %v80, %v79
  %v93 = vpack.c.b16 %v82, %v81
  %v94 = vpack.c.b16 %v84, %v83
  %v95 = vpack.c.b16 %v86, %v85
  %v96 = vpack.c.b16 %v88, %v87
  %v121 = vunpack.c.l.b16 %v34
  %v122 = vunpack.c.l.b16 %v35
  %v123 = vunpack.c.l.b16 %v36
  %v124 = vunpack.c.l.b16 %v37
  %v125 = vunpack.c.l.b16 %v38
  %v126 = vunpack.c.l.b16 %v39
  %v127 = vunpack.c.l.b16 %v40
  %v128 = vunpack.c.l.b16 %v41
  %v129 = vunpack.c.l.b16 %v42
  %v130 = vunpack.c.l.b16 %v43
  %v131 = vunpack.c.l.b16 %v44
  %v132 = vunpack.c.l.b16 %v45
  %v133 = vunpack.c.l.b16 %v46
  %v134 = vunpack.c.l.b16 %v47
  %v135 = vunpack.c.l.b16 %v48
  %v136 = vunpack.c.l.b16 %v49
  %v137 = vpack.c.b16 %v122, %v121
  %v138 = vpack.c.b16 %v124, %v123
  %v139 = vpack.c.b16 %v126, %v125
  %v140 = vpack.c.b16 %v128, %v127
  %v141 = vpack.c.b16 %v130, %v129
  %v142 = vpack.c.b16 %v132, %v131
  %v143 = vpack.c.b16 %v134, %v133
  %v144 = vpack.c.b16 %v136, %v135
  %153 = vmatprep.subr.bf16.mxu0 0
  %154 = vmatpush1.bf16.msra.mxu0 %v137
  %155 = vmatprep.subr.bf16.mxu0 0
  %156 = vmatpush1.bf16.msra.mxu0 %v138
  %157 = vmatprep.subr.bf16.mxu0 0
  %158 = vmatpush1.bf16.msra.mxu0 %v139
  %159 = vmatprep.subr.bf16.mxu0 0
  %160 = vmatpush1.bf16.msra.mxu0 %v140
  %161 = vmatprep.subr.bf16.mxu0 0
  %162 = vmatpush1.bf16.msra.mxu0 %v141
  %163 = vmatprep.subr.bf16.mxu0 0
  %164 = vmatpush1.bf16.msra.mxu0 %v142
  %165 = vmatprep.subr.bf16.mxu0 0
  %166 = vmatpush1.bf16.msra.mxu0 %v143
  %167 = vmatprep.subr.bf16.mxu0 0
  %168 = vmatpush1.bf16.msra.mxu0 %v144
  %169 = vmatprep.subr.bf16.mxu0 0
  %170 = vmatpush1.bf16.msra.mxu0 0
  %171 = vmatprep.subr.bf16.mxu0 0
  %172 = vmatpush1.bf16.msra.mxu0 0
  %173 = vmatprep.subr.bf16.mxu0 0
  %174 = vmatpush1.bf16.msra.mxu0 0
  %175 = vmatprep.subr.bf16.mxu0 0
  %176 = vmatpush1.bf16.msra.mxu0 0
  %177 = vmatprep.subr.bf16.mxu0 0
  %178 = vmatpush1.bf16.msra.mxu0 0
  %179 = vmatprep.subr.bf16.mxu0 0
  %180 = vmatpush1.bf16.msra.mxu0 0
  %181 = vmatprep.subr.bf16.mxu0 0
  %182 = vmatpush1.bf16.msra.mxu0 0
  %183 = vmatprep.subr.bf16.mxu0 0
  %184 = vmatpush1.bf16.msra.mxu0 0
  %185 = vmatprep.mubr.bf16.mxu0 0
  %186 = vmatmul.mubr.bf16.gmra.mrb[0].mxu0 %v89
  %v187 = vpop.f32.mrb[0].mxu0
  %v188 = vadd.f32 %v55, %v187
  %v189 = vpop.f32.mrb[0].mxu0
  %v190 = vpop.f32.mrb[0].mxu0
  %v191 = vadd.f32 %v55, %v190
  %v192 = vpop.f32.mrb[0].mxu0
  %193 = vmatprep.mubr.bf16.mxu0 0
  %194 = vmatmul.mubr.bf16.gmra.mrb[0].mxu0 %v90
  %v195 = vpop.f32.mrb[0].mxu0
  %v196 = vadd.f32 %v55, %v195
  %v197 = vpop.f32.mrb[0].mxu0
  %v198 = vpop.f32.mrb[0].mxu0
  %v199 = vadd.f32 %v55, %v198
  %v200 = vpop.f32.mrb[0].mxu0
  %201 = vmatprep.mubr.bf16.mxu0 0
  %202 = vmatmul.mubr.bf16.gmra.mrb[0].mxu0 %v91
  %v203 = vpop.f32.mrb[0].mxu0
  %v204 = vadd.f32 %v55, %v203
  %v205 = vpop.f32.mrb[0].mxu0
  %v206 = vpop.f32.mrb[0].mxu0
  %v207 = vadd.f32 %v55, %v206
  %v208 = vpop.f32.mrb[0].mxu0
  %209 = vmatprep.mubr.bf16.mxu0 0
  %210 = vmatmul.mubr.bf16.gmra.mrb[0].mxu0 %v92
  %v211 = vpop.f32.mrb[0].mxu0
  %v212 = vadd.f32 %v55, %v211
  %v213 = vpop.f32.mrb[0].mxu0
  %v214 = vpop.f32.mrb[0].mxu0
  %v215 = vadd.f32 %v55, %v214
  %v216 = vpop.f32.mrb[0].mxu0
  %217 = vmatprep.mubr.bf16.mxu0 0
  %218 = vmatmul.mubr.bf16.gmra.mrb[0].mxu0 %v93
  %v219 = vpop.f32.mrb[0].mxu0
  %v220 = vadd.f32 %v55, %v219
  %v221 = vpop.f32.mrb[0].mxu0
  %v222 = vpop.f32.mrb[0].mxu0
  %v223 = vadd.f32 %v55, %v222
  %v224 = vpop.f32.mrb[0].mxu0
  %225 = vmatprep.mubr.bf16.mxu0 0
  %226 = vmatmul.mubr.bf16.gmra.mrb[0].mxu0 %v94
  %v227 = vpop.f32.mrb[0].mxu0
  %v228 = vadd.f32 %v55, %v227
  %v229 = vpop.f32.mrb[0].mxu0
  %v230 = vpop.f32.mrb[0].mxu0
  %v231 = vadd.f32 %v55, %v230
  %v232 = vpop.f32.mrb[0].mxu0
  %233 = vmatprep.mubr.bf16.mxu0 0
  %234 = vmatmul.mubr.bf16.gmra.mrb[0].mxu0 %v95
  %v235 = vpop.f32.mrb[0].mxu0
  %v236 = vadd.f32 %v55, %v235
  %v237 = vpop.f32.mrb[0].mxu0
  %v238 = vpop.f32.mrb[0].mxu0
  %v239 = vadd.f32 %v55, %v238
  %v240 = vpop.f32.mrb[0].mxu0
  %241 = vmatprep.mubr.bf16.mxu0 0
  %242 = vmatmul.mubr.bf16.gmra.mrb[0].mxu0 %v96
  %v243 = vpop.f32.mrb[0].mxu0
  %v244 = vadd.f32 %v55, %v243
  %v245 = vpop.f32.mrb[0].mxu0
  %v246 = vpop.f32.mrb[0].mxu0
  %v247 = vadd.f32 %v55, %v246
  %v248 = vpop.f32.mrb[0].mxu0
  %249 = vdwg.mxu0
  %v250 = vmax.f32 %v188, 0.0
  %v251 = vmax.f32 %v191, 0.0
  %v252 = vmax.f32 %v196, 0.0
  %v253 = vmax.f32 %v199, 0.0
  %v254 = vmax.f32 %v204, 0.0
  %v255 = vmax.f32 %v207, 0.0
  %v256 = vmax.f32 %v212, 0.0
  %v257 = vmax.f32 %v215, 0.0
  %v258 = vmax.f32 %v220, 0.0
  %v259 = vmax.f32 %v223, 0.0
  %v260 = vmax.f32 %v228, 0.0
  %v261 = vmax.f32 %v231, 0.0
  %v262 = vmax.f32 %v236, 0.0
  %v263 = vmax.f32 %v239, 0.0
  %v264 = vmax.f32 %v244, 0.0
  %v265 = vmax.f32 %v247, 0.0
  %v266 = vpack.c.bf16 %v251, %v250
  %v267 = vpack.c.bf16 %v253, %v252
  %v268 = vpack.c.bf16 %v255, %v254
  %v269 = vpack.c.bf16 %v257, %v256
  %v270 = vpack.c.bf16 %v259, %v258
  %v271 = vpack.c.bf16 %v261, %v260
  %v272 = vpack.c.bf16 %v263, %v262
  %v273 = vpack.c.bf16 %v265, %v264
  %v274 = vld [vmem:[%s3] sm:$0xf]
  %v275 = vld [vmem:[%s3 + $0x4] sm:$0xf]
  %v276 = vld [vmem:[%s3 + $0x8] sm:$0xf]
  %v277 = vld [vmem:[%s3 + $0xc] sm:$0xf]
  %v278 = vld [vmem:[%s3 + $0x10] sm:$0xf]
  %v279 = vld [vmem:[%s3 + $0x14] sm:$0xf]
  %v280 = vld [vmem:[%s3 + $0x18] sm:$0xf]
  %v281 = vld [vmem:[%s3 + $0x1c] sm:$0xf]
  %v282 = vld [vmem:[%s3 + $0x20] sm:$0xf]
  %v283 = vld [vmem:[%s3 + $0x24] sm:$0xf]
  %v284 = vld [vmem:[%s3 + $0x28] sm:$0xf]
  %v285 = vld [vmem:[%s3 + $0x2c] sm:$0xf]
  %v286 = vld [vmem:[%s3 + $0x30] sm:$0xf]
  %v287 = vld [vmem:[%s3 + $0x34] sm:$0xf]
  %v288 = vld [vmem:[%s3 + $0x38] sm:$0xf]
  %v289 = vld [vmem:[%s3 + $0x3c] sm:$0xf]
  %v306 = vunpack.c.l.b16 %v274
  %v307 = vunpack.c.l.b16 %v275
  %v308 = vunpack.c.l.b16 %v276
  %v309 = vunpack.c.l.b16 %v277
  %v310 = vunpack.c.l.b16 %v278
  %v311 = vunpack.c.l.b16 %v279
  %v312 = vunpack.c.l.b16 %v280
  %v313 = vunpack.c.l.b16 %v281
  %v314 = vunpack.c.l.b16 %v282
  %v315 = vunpack.c.l.b16 %v283
  %v316 = vunpack.c.l.b16 %v284
  %v317 = vunpack.c.l.b16 %v285
  %v318 = vunpack.c.l.b16 %v286
  %v319 = vunpack.c.l.b16 %v287
  %v320 = vunpack.c.l.b16 %v288
  %v321 = vunpack.c.l.b16 %v289
  %v322 = vpack.c.b16 %v307, %v306
  %v323 = vpack.c.b16 %v309, %v308
  %v324 = vpack.c.b16 %v311, %v310
  %v325 = vpack.c.b16 %v313, %v312
  %v326 = vpack.c.b16 %v315, %v314
  %v327 = vpack.c.b16 %v317, %v316
  %v328 = vpack.c.b16 %v319, %v318
  %v329 = vpack.c.b16 %v321, %v320
  %338 = vmatprep.subr.bf16.mxu0 0
  %339 = vmatpush1.bf16.msra.mxu0 %v322
  %340 = vmatprep.subr.bf16.mxu0 0
  %341 = vmatpush1.bf16.msra.mxu0 %v323
  %342 = vmatprep.subr.bf16.mxu0 0
  %343 = vmatpush1.bf16.msra.mxu0 %v324
  %344 = vmatprep.subr.bf16.mxu0 0
  %345 = vmatpush1.bf16.msra.mxu0 %v325
  %346 = vmatprep.subr.bf16.mxu0 0
  %347 = vmatpush1.bf16.msra.mxu0 %v326
  %348 = vmatprep.subr.bf16.mxu0 0
  %349 = vmatpush1.bf16.msra.mxu0 %v327
  %350 = vmatprep.subr.bf16.mxu0 0
  %351 = vmatpush1.bf16.msra.mxu0 %v328
  %352 = vmatprep.subr.bf16.mxu0 0
  %353 = vmatpush1.bf16.msra.mxu0 %v329
  %354 = vmatprep.subr.bf16.mxu0 0
  %355 = vmatpush1.bf16.msra.mxu0 0
  %356 = vmatprep.subr.bf16.mxu0 0
  %357 = vmatpush1.bf16.msra.mxu0 0
  %358 = vmatprep.subr.bf16.mxu0 0
  %359 = vmatpush1.bf16.msra.mxu0 0
  %360 = vmatprep.subr.bf16.mxu0 0
  %361 = vmatpush1.bf16.msra.mxu0 0
  %362 = vmatprep.subr.bf16.mxu0 0
  %363 = vmatpush1.bf16.msra.mxu0 0
  %364 = vmatprep.subr.bf16.mxu0 0
  %365 = vmatpush1.bf16.msra.mxu0 0
  %366 = vmatprep.subr.bf16.mxu0 0
  %367 = vmatpush1.bf16.msra.mxu0 0
  %368 = vmatprep.subr.bf16.mxu0 0
  %369 = vmatpush1.bf16.msra.mxu0 0
  %370 = vmatprep.mubr.bf16.mxu0 0
  %371 = vmatmul.mubr.bf16.gmra.mrb[0].mxu0 %v266
  %v372 = vpop.f32.mrb[0].mxu0
  %v373 = vadd.f32 0.0, %v372
  %v374 = vpop.f32.mrb[0].mxu0
  %v375 = vpop.f32.mrb[0].mxu0
  %v376 = vadd.f32 0.0, %v375
  %v377 = vpop.f32.mrb[0].mxu0
  %378 = vmatprep.mubr.bf16.mxu0 0
  %379 = vmatmul.mubr.bf16.gmra.mrb[0].mxu0 %v267
  %v380 = vpop.f32.mrb[0].mxu0
  %v381 = vadd.f32 0.0, %v380
  %v382 = vpop.f32.mrb[0].mxu0
  %v383 = vpop.f32.mrb[0].mxu0
  %v384 = vadd.f32 0.0, %v383
  %v385 = vpop.f32.mrb[0].mxu0
  %386 = vmatprep.mubr.bf16.mxu0 0
  %387 = vmatmul.mubr.bf16.gmra.mrb[0].mxu0 %v268
  %v388 = vpop.f32.mrb[0].mxu0
  %v389 = vadd.f32 0.0, %v388
  %v390 = vpop.f32.mrb[0].mxu0
  %v391 = vpop.f32.mrb[0].mxu0
  %v392 = vadd.f32 0.0, %v391
  %v393 = vpop.f32.mrb[0].mxu0
  %394 = vmatprep.mubr.bf16.mxu0 0
  %395 = vmatmul.mubr.bf16.gmra.mrb[0].mxu0 %v269
  %v396 = vpop.f32.mrb[0].mxu0
  %v397 = vadd.f32 0.0, %v396
  %v398 = vpop.f32.mrb[0].mxu0
  %v399 = vpop.f32.mrb[0].mxu0
  %v400 = vadd.f32 0.0, %v399
  %v401 = vpop.f32.mrb[0].mxu0
  %402 = vmatprep.mubr.bf16.mxu0 0
  %403 = vmatmul.mubr.bf16.gmra.mrb[0].mxu0 %v270
  %v404 = vpop.f32.mrb[0].mxu0
  %v405 = vadd.f32 0.0, %v404
  %v406 = vpop.f32.mrb[0].mxu0
  %v407 = vpop.f32.mrb[0].mxu0
  %v408 = vadd.f32 0.0, %v407
  %v409 = vpop.f32.mrb[0].mxu0
  %410 = vmatprep.mubr.bf16.mxu0 0
  %411 = vmatmul.mubr.bf16.gmra.mrb[0].mxu0 %v271
  %v412 = vpop.f32.mrb[0].mxu0
  %v413 = vadd.f32 0.0, %v412
  %v414 = vpop.f32.mrb[0].mxu0
  %v415 = vpop.f32.mrb[0].mxu0
  %v416 = vadd.f32 0.0, %v415
  %v417 = vpop.f32.mrb[0].mxu0
  %418 = vmatprep.mubr.bf16.mxu0 0
  %419 = vmatmul.mubr.bf16.gmra.mrb[0].mxu0 %v272
  %v420 = vpop.f32.mrb[0].mxu0
  %v421 = vadd.f32 0.0, %v420
  %v422 = vpop.f32.mrb[0].mxu0
  %v423 = vpop.f32.mrb[0].mxu0
  %v424 = vadd.f32 0.0, %v423
  %v425 = vpop.f32.mrb[0].mxu0
  %426 = vmatprep.mubr.bf16.mxu0 0
  %427 = vmatmul.mubr.bf16.gmra.mrb[0].mxu0 %v273
  %v428 = vpop.f32.mrb[0].mxu0
  %v429 = vadd.f32 0.0, %v428
  %v430 = vpop.f32.mrb[0].mxu0
  %v431 = vpop.f32.mrb[0].mxu0
  %v432 = vadd.f32 0.0, %v431
  %v433 = vpop.f32.mrb[0].mxu0
  %434 = vdwg.mxu0
  %v435 = vpack.c.bf16 %v376, %v373
  %v436 = vpack.c.bf16 %v384, %v381
  %v437 = vpack.c.bf16 %v392, %v389
  %v438 = vpack.c.bf16 %v400, %v397
  %v439 = vpack.c.bf16 %v408, %v405
  %v440 = vpack.c.bf16 %v416, %v413
  %v441 = vpack.c.bf16 %v424, %v421
  %v442 = vpack.c.bf16 %v432, %v429
  %v451 = vunpack.c.l.b16 %v435
  %v452 = vunpack.c.h.b16 %v435
  %v453 = vunpack.c.l.b16 %v436
  %v454 = vunpack.c.h.b16 %v436
  %v455 = vunpack.c.l.b16 %v437
  %v456 = vunpack.c.h.b16 %v437
  %v457 = vunpack.c.l.b16 %v438
  %v458 = vunpack.c.h.b16 %v438
  %v459 = vunpack.c.l.b16 %v439
  %v460 = vunpack.c.h.b16 %v439
  %v461 = vunpack.c.l.b16 %v440
  %v462 = vunpack.c.h.b16 %v440
  %v463 = vunpack.c.l.b16 %v441
  %v464 = vunpack.c.h.b16 %v441
  %v465 = vunpack.c.l.b16 %v442
  %v466 = vunpack.c.h.b16 %v442
  %v467 = vpack.c.b16 %v451, %v451
  %v468 = vpack.c.b16 %v452, %v452
  %v469 = vpack.c.b16 %v453, %v453
  %v470 = vpack.c.b16 %v454, %v454
  %v471 = vpack.c.b16 %v455, %v455
  %v472 = vpack.c.b16 %v456, %v456
  %v473 = vpack.c.b16 %v457, %v457
  %v474 = vpack.c.b16 %v458, %v458
  %v475 = vpack.c.b16 %v459, %v459
  %v476 = vpack.c.b16 %v460, %v460
  %v477 = vpack.c.b16 %v461, %v461
  %v478 = vpack.c.b16 %v462, %v462
  %v479 = vpack.c.b16 %v463, %v463
  %v480 = vpack.c.b16 %v464, %v464
  %v481 = vpack.c.b16 %v465, %v465
  %v482 = vpack.c.b16 %v466, %v466
  %499 = vst [vmem:[%s4] sm:$0xf] %v467
  %500 = vst [vmem:[%s4 + $0x4] sm:$0xf] %v468
  %501 = vst [vmem:[%s4 + $0x8] sm:$0xf] %v469
  %502 = vst [vmem:[%s4 + $0xc] sm:$0xf] %v470
  %503 = vst [vmem:[%s4 + $0x10] sm:$0xf] %v471
  %504 = vst [vmem:[%s4 + $0x14] sm:$0xf] %v472
  %505 = vst [vmem:[%s4 + $0x18] sm:$0xf] %v473
  %506 = vst [vmem:[%s4 + $0x1c] sm:$0xf] %v474
  %507 = vst [vmem:[%s4 + $0x20] sm:$0xf] %v475
  %508 = vst [vmem:[%s4 + $0x24] sm:$0xf] %v476
  %509 = vst [vmem:[%s4 + $0x28] sm:$0xf] %v477
  %510 = vst [vmem:[%s4 + $0x2c] sm:$0xf] %v478
  %511 = vst [vmem:[%s4 + $0x30] sm:$0xf] %v479
  %512 = vst [vmem:[%s4 + $0x34] sm:$0xf] %v480
  %513 = vst [vmem:[%s4 + $0x38] sm:$0xf] %v481
  %514 = vst [vmem:[%s4 + $0x3c] sm:$0xf] %v482
  // Predicated region
  $region18: #{discriminator_forward.2} parent=0 // pred_check
    _
  $region19: #{discriminator_forward.2} parent=0 // pred_check_branch
    %516 = sbr.rel (0) target = $region21
  $region20: #{discriminator_forward.2} parent=0 // pred_region
    _
  $region21: #{discriminator_forward.2} parent=0 // pred_fallthru
    _
  // Predicated region
  $region22: #{discriminator_forward.2} parent=0 // pred_check
    _
  $region23: #{discriminator_forward.2} parent=0 // pred_check_branch
    %518 = sbr.rel (0) target = $region25
  $region24: #{discriminator_forward.2} parent=0 // pred_region
    _
  $region25: #{discriminator_forward.2} parent=0 // pred_fallthru
    _

</llo_original>
